<compile_context>
chip_gen: v7x
topology: tpu7x:2x2x1
jax: 0.10.0
libtpu: 0.0.40
codegen_flags: <defaults>
</compile_context>

<pallas_src>
import jax
import jax.numpy as jnp
from jax.experimental import pallas as pl
from jax.experimental.pallas import tpu as pltpu

_LANE = 128
_SUBLANE = 8


def _kd_ce_kernel(out_ref, tgt_ref, part_ref):
    """Accumulates sum(target * log(outputs)) for one batch partition.

    part_ref is a (rows, tile_c) f32 accumulator resident in VMEM across the
    two reduction grid axes (batch tiles, class tiles)."""
    j = pl.program_id(1)   # batch-tile index within this partition
    k = pl.program_id(2)   # class-tile index

    @pl.when(jnp.logical_and(j == 0, k == 0))
    def _init():
        part_ref[...] = jnp.zeros_like(part_ref)

    x = out_ref[...].astype(jnp.float32)        # (tile_b, tile_c)
    t = tgt_ref[...].astype(jnp.float32)
    prod = t * jnp.log(x)                       # EUP log + VPU mul

    tb, tc = prod.shape
    rows = part_ref.shape[0]
    if tb != rows:
        # Fold tile_b rows down onto the 8-sublane accumulator. The reshape
        # only splits whole 8-row sublane groups, so the sum is pure vreg-wise
        # VPU adds — no cross-lane/XLU traffic per tile.
        prod = prod.reshape(tb // rows, rows, tc).sum(axis=0)
    part_ref[...] += prod


def _choose_tiles(B, C, in_itemsize_sum):
    """Pick lane-aligned (tile_b, tile_c) under a ~16 MiB double-buffer budget."""
    # Class tile: largest "nice" multiple of 128 that divides C, capped at 2048.
    if C % _LANE == 0:
        tile_c = _LANE
        for cand in (2048, 1024, 512, 256, 128):
            if cand <= C and C % cand == 0:
                tile_c = cand
                break
    else:
        tile_c = C  # block == full class dim is always a legal BlockSpec

    # Batch tile: largest multiple of 8 dividing B such that the
    # double-buffered pair of input blocks stays within ~16 MiB.
    budget = 16 * 2**20
    max_rows = max(_SUBLANE, budget // (2 * tile_c * in_itemsize_sum))
    if B % _SUBLANE == 0:
        limit = min(B, 2048, max_rows)
        tile_b = _SUBLANE
        d = _SUBLANE
        while d <= limit:
            if B % d == 0:
                tile_b = d
            d += _SUBLANE
    else:
        # Small / ragged batch: one full-batch block (legal since it equals
        # the full array dim).
        tile_b = B
    return tile_b, tile_c


def kd_soft_cross_entropy(outputs, target):
    """loss = mean(-sum(target * log(outputs), axis=1)) via a Pallas kernel."""
    assert outputs.shape == target.shape and outputs.ndim == 2
    B, C = outputs.shape

    isz = jnp.dtype(outputs.dtype).itemsize + jnp.dtype(target.dtype).itemsize
    tile_b, tile_c = _choose_tiles(B, C, isz)

    n_batch_tiles = B // tile_b
    n_class_tiles = C // tile_c
    # Leading partition axis ("parallel") so v7x's two TensorCores can each
    # stream half the batch; harmless (sequential) on single-TC v5e/v6e.
    num_parts = 2 if (n_batch_tiles >= 2 and n_batch_tiles % 2 == 0) else 1
    tiles_per_part = n_batch_tiles // num_parts
    acc_rows = _SUBLANE if tile_b % _SUBLANE == 0 else tile_b

    # Explicit scoped-VMEM limit: double-buffered input pair + double-buffered
    # output accumulator, with ~2x headroom (well under v7x's 64 MiB physical).
    in_bytes = 2 * tile_b * tile_c * isz            # 2 buffers x (outputs+target)
    out_bytes = 2 * acc_rows * tile_c * 4
    vmem_limit = int(min(48 * 2**20, max(2 * (in_bytes + out_bytes), 20 * 2**20)))

    partials = pl.pallas_call(
        _kd_ce_kernel,
        out_shape=jax.ShapeDtypeStruct((num_parts, acc_rows, tile_c), jnp.float32),
        grid_spec=pltpu.PrefetchScalarGridSpec(
            num_scalar_prefetch=0,
            grid=(num_parts, tiles_per_part, n_class_tiles),
            in_specs=[
                pl.BlockSpec((tile_b, tile_c),
                             lambda p, j, k: (p * tiles_per_part + j, k)),
                pl.BlockSpec((tile_b, tile_c),
                             lambda p, j, k: (p * tiles_per_part + j, k)),
            ],
            out_specs=pl.BlockSpec((None, acc_rows, tile_c),
                                   lambda p, j, k: (p, 0, 0)),
        ),
        compiler_params=pltpu.CompilerParams(
            dimension_semantics=("parallel", "arbitrary", "arbitrary"),
            vmem_limit_bytes=vmem_limit,
        ),
    )(outputs, target)

    # Tiny lane-dense partial tensor: final sum, negate and /B in plain JAX
    # (review: keep the divide / scalar reduce out of the hot loop).
    return -jnp.sum(partials) / jnp.float32(B)


if __name__ == "__main__":
    key = jax.random.PRNGKey(0)
    k1, k2, k3, k4, k5 = jax.random.split(key, 5)

    # --- OfflineKD.forward: teacher(x), student(x), stack ------------------
    # TODO(synk): the teacher/student sub-networks are opaque nn.Modules in the
    # spec; modeled here as small dense layers in plain JAX, and the
    # torch.stack of the two logits is a pure layout op (jnp.stack), so the
    # Pallas kernel implements the KD soft cross-entropy applied to them.
    B, D, C = 8, 32, 128
    x = jax.random.normal(k1, (B, D), jnp.float32)
    w_t = jax.random.normal(k2, (D, C), jnp.float32) / jnp.sqrt(D)
    w_s = jax.random.normal(k3, (D, C), jnp.float32) / jnp.sqrt(D)
    teacher_logits = x @ w_t
    student_logits = x @ w_s
    stacked = jnp.stack([teacher_logits, student_logits], axis=0)   # (2, B, C)
    assert stacked.shape == (2, B, C)

    # --- KD soft cross entropy between the stacked logits (Pallas) ---------
    outputs = jax.nn.softmax(student_logits, axis=1)   # student probabilities
    target = jax.nn.softmax(teacher_logits, axis=1)    # teacher soft labels
    loss = kd_soft_cross_entropy(outputs, target)
    jax.block_until_ready(loss)
    ref = jnp.mean(-jnp.sum(target * jnp.log(outputs), axis=1))
    assert jnp.allclose(loss, ref, rtol=1e-5, atol=1e-6), (loss, ref)

    # --- second check: native bf16 inputs, multi class-tile path -----------
    B2, C2 = 16, 384
    o2 = jax.nn.softmax(jax.random.normal(k4, (B2, C2), jnp.float32), axis=1)
    t2 = jax.nn.softmax(jax.random.normal(k5, (B2, C2), jnp.float32), axis=1)
    o2 = o2.astype(jnp.bfloat16)
    t2 = t2.astype(jnp.bfloat16)
    loss2 = kd_soft_cross_entropy(o2, t2)
    jax.block_until_ready(loss2)
    o2f = o2.astype(jnp.float32)
    t2f = t2.astype(jnp.float32)
    ref2 = jnp.mean(-jnp.sum(t2f * jnp.log(o2f), axis=1))
    assert jnp.allclose(loss2, ref2, rtol=1e-5, atol=1e-5), (loss2, ref2)

    print("KERNEL_OK")
</pallas_src>

<mosaic_0001>
module attributes {stable_mosaic.version = 11 : i64} {
  func.func @_kd_ce_kernel(%arg0: i32, %arg1: i32, %arg2: i32, %arg3: memref<8x128xf32, #tpu.memory_space<vmem>>, %arg4: memref<8x128xf32, #tpu.memory_space<vmem>>, %arg5: memref<1x8x128xf32, #tpu.memory_space<vmem>>) attributes {dimension_semantics = [#tpu.dimension_semantics<parallel>, #tpu.dimension_semantics<arbitrary>, #tpu.dimension_semantics<arbitrary>], iteration_bounds = array<i64: 1, 1, 1>, scalar_prefetch = 0 : i64, scratch_operands = 0 : i64, tpu.core_type = #tpu.core_type<tc>, window_params = [{transform_indices = @transform_0, window_bounds = array<i64: 8, 128>}, {transform_indices = @transform_1, window_bounds = array<i64: 8, 128>}, {transform_indices = @transform_2, window_bounds = array<i64: 1, 8, 128>}]} {
    %c0_i32 = arith.constant 0 : i32
    %0 = arith.cmpi eq, %arg1, %c0_i32 : i32
    %c0_i32_0 = arith.constant 0 : i32
    %1 = arith.cmpi eq, %arg2, %c0_i32_0 : i32
    %2 = arith.andi %0, %1 : i1
    %3 = arith.extui %2 : i1 to i32
    %c0_i32_1 = arith.constant 0 : i32
    %4 = arith.cmpi ne, %3, %c0_i32_1 : i32
    scf.if %4 {
      %cst = arith.constant 0.000000e+00 : f32
      %15 = vector.broadcast %cst : f32 to vector<8x128xf32>
      %c0_11 = arith.constant 0 : index
      %c0_12 = arith.constant 0 : index
      %c0_13 = arith.constant 0 : index
      %16 = vector.load %arg5[%c0_11, %c0_12, %c0_13] : memref<1x8x128xf32, #tpu.memory_space<vmem>>, vector<1x8x128xf32>
      %17 = vector.shape_cast %16 : vector<1x8x128xf32> to vector<8x128xf32>
      %18 = vector.shape_cast %15 : vector<8x128xf32> to vector<1x8x128xf32>
      tpu.vector_store %arg5[%c0_11, %c0_12, %c0_13], %18 {strides = array<i32>} : memref<1x8x128xf32, #tpu.memory_space<vmem>>, vector<1x8x128xf32>,
    } else {
    }
    %c0 = arith.constant 0 : index
    %c0_2 = arith.constant 0 : index
    %5 = vector.load %arg3[%c0, %c0_2] : memref<8x128xf32, #tpu.memory_space<vmem>>, vector<8x128xf32>
    %c0_3 = arith.constant 0 : index
    %c0_4 = arith.constant 0 : index
    %6 = vector.load %arg4[%c0_3, %c0_4] : memref<8x128xf32, #tpu.memory_space<vmem>>, vector<8x128xf32>
    %7 = math.log %5 : vector<8x128xf32>
    %8 = arith.mulf %6, %7 : vector<8x128xf32>
    %c0_5 = arith.constant 0 : index
    %c0_6 = arith.constant 0 : index
    %c0_7 = arith.constant 0 : index
    %9 = vector.load %arg5[%c0_5, %c0_6, %c0_7] : memref<1x8x128xf32, #tpu.memory_space<vmem>>, vector<1x8x128xf32>
    %10 = vector.shape_cast %9 : vector<1x8x128xf32> to vector<8x128xf32>
    %11 = arith.addf %10, %8 : vector<8x128xf32>
    %c0_8 = arith.constant 0 : index
    %c0_9 = arith.constant 0 : index
    %c0_10 = arith.constant 0 : index
    %12 = vector.load %arg5[%c0_8, %c0_9, %c0_10] : memref<1x8x128xf32, #tpu.memory_space<vmem>>, vector<1x8x128xf32>
    %13 = vector.shape_cast %12 : vector<1x8x128xf32> to vector<8x128xf32>
    %14 = vector.shape_cast %11 : vector<8x128xf32> to vector<1x8x128xf32>
    tpu.vector_store %arg5[%c0_8, %c0_9, %c0_10], %14 {strides = array<i32>} : memref<1x8x128xf32, #tpu.memory_space<vmem>>, vector<1x8x128xf32>,
    return
  }
  func.func @transform_0(%arg0: i32, %arg1: i32, %arg2: i32) -> (i32, i32) {
    %c1_i32 = arith.constant 1 : i32
    %0 = arith.muli %arg0, %c1_i32 : i32
    %1 = arith.addi %0, %arg1 : i32
    %c0_i32 = arith.constant 0 : i32
    return %1, %arg2 : i32, i32
  }
  func.func @transform_1(%arg0: i32, %arg1: i32, %arg2: i32) -> (i32, i32) {
    %c1_i32 = arith.constant 1 : i32
    %0 = arith.muli %arg0, %c1_i32 : i32
    %1 = arith.addi %0, %arg1 : i32
    %c0_i32 = arith.constant 0 : i32
    return %1, %arg2 : i32, i32
  }
  func.func @transform_2(%arg0: i32, %arg1: i32, %arg2: i32) -> (i32, i32, i32) {
    %c0_i32 = arith.constant 0 : i32
    %c0_i32_0 = arith.constant 0 : i32
    %c0_i32_1 = arith.constant 0 : i32
    return %arg0, %c0_i32, %c0_i32_0 : i32, i32, i32
  }
}

</mosaic_0001>

<llo_original>
// kernel: tpu_custom_call.1
$region0: #{tpu_custom_call.1}
  #allocation0 [shape = 'u32[]', space=smem, size = 0x4, offset = 0x4, fixed_abs, tag = 'smem constant byte address 0x4 - core index']
  #allocation1 [shape = 'u32[144,128]{1,0:T(1,128)}', space=vmem, size = 0x12000, scoped, tag = 'internal scratch']
  %s0 = inlined_call_operand.hbm [shape: f32[8,128], index: 0, kind: input, shape index: {}]
  %s1 = inlined_call_operand.hbm [shape: f32[8,128], index: 1, kind: input, shape index: {}]
  %s2 = inlined_call_operand.hbm [shape: f32[1,8,128], index: 2, kind: output, shape index: {}]
  %s3 = sld [smem:[#allocation0]]
  $region30: #{tpu_custom_call.1} parent=0
    _
  %s5 = ssub.s32 1, %s3
  %s6 = scalar_select 0, %s5, %s3
  $region1: #{tpu_custom_call.1} parent=0
    #allocation2 [shape = 'u8[4096]{0}', space=vmem, size = 0x1000, scoped, tag = 'input window, operand 0, single buffered']
    #allocation3 [shape = 's32[1]{0}', space=sflag, size = 0x4, scoped, tag = 'scoped memory for tpu_custom_call.1']
    #allocation4 [shape = 's32[1]{0}', space=sflag, size = 0x4, scoped, tag = 'scoped memory for tpu_custom_call.1']
    #allocation5 [shape = 'u8[4096]{0}', space=vmem, size = 0x1000, scoped, tag = 'input window, operand 1, single buffered']
    #allocation6 [shape = 's32[1]{0}', space=sflag, size = 0x4, scoped, tag = 'scoped memory for tpu_custom_call.1']
    #allocation7 [shape = 'u8[4096]{0}', space=vmem, size = 0x1000, scoped, tag = 'output window, operand 0, single buffered']
    %7 = vsyncpa [#allocation3], 0
    %8 = vsyncpa [#allocation6], 0
    %9 = vsyncpa [#allocation4], 0
    // Predicated region
    $region2: #{tpu_custom_call.1} parent=1 // pred_check
      _
    $region3: #{tpu_custom_call.1} parent=1 // pred_check_branch
      %11 = sbr.rel (0) target = $region5
    $region4: #{tpu_custom_call.1} parent=1 // pred_region
      %s12 = sadd.s32 0, 0
      %s14 = ssub.s32 128, 128
      %15 = vsyncadd [#allocation3], %s14
      %s16 = smul.addr %s12, 128
      %s17 = scalar_lea.hbm %s0, %s16
      %s19 = sshll.u32 [#allocation2], 4
      %s20 = int_to_ptr.vmem [resolvable:$true] %s19
      %22 = dma.hbm_to_vmem [thread:$0]  %s17, 128, %s20, [#allocation3]
    $region5: #{tpu_custom_call.1} parent=1 // pred_fallthru
      _
    // Predicated region
    $region6: #{tpu_custom_call.1} parent=1 // pred_check
      _
    $region7: #{tpu_custom_call.1} parent=1 // pred_check_branch
      %24 = sbr.rel (0) target = $region9
    $region8: #{tpu_custom_call.1} parent=1 // pred_region
      %s25 = sadd.s32 0, 0
      %s27 = ssub.s32 128, 128
      %28 = vsyncadd [#allocation6], %s27
      %s29 = smul.addr %s25, 128
      %s30 = scalar_lea.hbm %s1, %s29
      %s32 = sshll.u32 [#allocation5], 4
      %s33 = int_to_ptr.vmem [resolvable:$true] %s32
      %35 = dma.hbm_to_vmem [thread:$0]  %s30, 128, %s33, [#allocation6]
    $region9: #{tpu_custom_call.1} parent=1 // pred_fallthru
      _
    // Predicated region
    $region10: #{tpu_custom_call.1} parent=1 // pred_check
      _
    $region11: #{tpu_custom_call.1} parent=1 // pred_check_branch
      %37 = sbr.rel (0) target = $region13
    $region12: #{tpu_custom_call.1} parent=1 // pred_region
      %38 = dma.done [#allocation3], 128
    $region13: #{tpu_custom_call.1} parent=1 // pred_fallthru
      _
    // Predicated region
    $region14: #{tpu_custom_call.1} parent=1 // pred_check
      _
    $region15: #{tpu_custom_call.1} parent=1 // pred_check_branch
      %40 = sbr.rel (0) target = $region17
    $region16: #{tpu_custom_call.1} parent=1 // pred_region
      %41 = dma.done [#allocation6], 128
    $region17: #{tpu_custom_call.1} parent=1 // pred_fallthru
      _
    %s42 = sadd.s32 0, 0
    %s43 = sadd.s32 0, 0
    %p44 = scmp.eq.s32.totalorder 0, 0
    %p45 = scmp.eq.s32.totalorder 0, 0
    %p46 = pnand %p44, %p45
    %p47 = pneg %p46
    // Predicated region
    $region18: #{tpu_custom_call.1} parent=1 // pred_check
      _
    $region19: #{tpu_custom_call.1} parent=1 // pred_check_branch
      %49 = sbr.rel (%p46) target = $region21
    $region20: #{tpu_custom_call.1} parent=1 // pred_region
      %50 = vst [vmem:[#allocation7] sm:$0xff] 0.0
    $region21: #{tpu_custom_call.1} parent=1 // pred_fallthru
      _
    %v51 = vld [vmem:[#allocation2] sm:$0xff]
    %v52 = vld [vmem:[#allocation5] sm:$0xff]
    %v53 = vlog2.pop %v51
    %v54 = vmul.f32 %v53, 0.6931472
    %v55 = vmul.f32 %v52, %v54
    %v56 = vld [vmem:[#allocation7] sm:$0xff]
    %v57 = vadd.f32 %v56, %v55
    %58 = vst [vmem:[#allocation7] sm:$0xff] %v57
    // Predicated region
    $region22: #{tpu_custom_call.1} parent=1 // pred_check
      _
    $region23: #{tpu_custom_call.1} parent=1 // pred_check_branch
      %60 = sbr.rel (0) target = $region25
    $region24: #{tpu_custom_call.1} parent=1 // pred_region
      %s62 = ssub.s32 128, 128
      %63 = vsyncadd [#allocation4], %s62
      %s65 = sshll.u32 [#allocation7], 4
      %s66 = int_to_ptr.vmem [resolvable:$true] %s65
      %68 = dma.vmem_to_hbm [thread:$0]  %s66, 128, %s2, [#allocation4]
    $region25: #{tpu_custom_call.1} parent=1 // pred_fallthru
      _
    // Predicated region
    $region26: #{tpu_custom_call.1} parent=1 // pred_check
      _
    $region27: #{tpu_custom_call.1} parent=1 // pred_check_branch
      %70 = sbr.rel (0) target = $region29
    $region28: #{tpu_custom_call.1} parent=1 // pred_region
      %71 = dma.done [#allocation4], 128
    $region29: #{tpu_custom_call.1} parent=1 // pred_fallthru
      _
    %72 = vsyncpa [#allocation3], 1
    %73 = vsyncpa [#allocation6], 1
    %74 = vsyncpa [#allocation4], 1

</llo_original>
